<compile_context>
chip_gen: v5e
topology: v5e:2x2
jax: 0.10.0
libtpu: 0.0.40
codegen_flags: <defaults>
</compile_context>

<pallas_src>
import jax
import jax.numpy as jnp
from jax.experimental import pallas as pl
from jax.experimental.pallas import tpu as pltpu


def _se_tail_kernel(x67_ref, w1t_ref, b1_ref, x64_ref, w2_ref, out_ref):
    """One (batch, spatial-tile) grid step.

    x67_ref : (10, 1)     squeezed SE input for this batch element (column)
    w1t_ref : (10, 240)   conv2d23 weight, transposed to (Cin, Cout)
    b1_ref  : (1, 240)    conv2d23 bias as a row
    x64_ref : (240, T)    spatial tile: channels on sublanes, H*W on lanes
    w2_ref  : (40, 240)   conv2d24 weight in PyTorch (Cout, Cin) layout
    out_ref : (40, T)
    """
    # SE gate in row layout: (10,240)*(10,1) -> sublane reduce -> (1,240).
    z = jnp.sum(w1t_ref[...] * x67_ref[...], axis=0, keepdims=True) + b1_ref[...]
    gate = jax.nn.sigmoid(z)                                  # (1, 240)

    # Fold the gate into the tiny projection weight instead of scaling the
    # (240, T) activation tile:  sum_c W2[o,c]*g[c]*x[c,hw].
    w2_scaled = w2_ref[...] * gate                            # (40, 240), f32
    if x64_ref.dtype == jnp.bfloat16 and w2_ref.dtype == jnp.bfloat16:
        # Keep the MXU on the single-pass bf16 path when the stream is bf16.
        w2_scaled = w2_scaled.astype(jnp.bfloat16)

    # 1x1 projection conv on the MXU: (40,240)@(240,T) -> lane-dense (40, T).
    out_ref[...] = jnp.dot(w2_scaled, x64_ref[...],
                           preferred_element_type=jnp.float32
                           ).astype(out_ref.dtype)


def _round_up(x, m):
    return ((x + m - 1) // m) * m


def _num_tensorcores_per_chip():
    """Best-effort query; falls back to 1 (single-TC default) on failure."""
    try:
        d = jax.devices()[0]
        for attr in ("num_cores", "core_count"):
            v = getattr(d, attr, None)
            if isinstance(v, int) and v > 0:
                return v
    except Exception:
        pass
    return 1


def _default_tile_hw(HW, N):
    # Cap the tile so double-buffered (x64 + out) tiles stay well inside the
    # scoped VMEM default even for large spatial extents (e.g. HW=12544).
    cap = 4096  # multiple of 128; (240+40)*4096*4B*2buf ~= 9 MiB
    tile = HW if HW <= cap else cap
    # If the grid would collapse to a single step and the chip has >1
    # TensorCore (v7x), split the spatial axis so both cores get work and
    # DMA overlaps compute.  Single-TC chips keep the one-tile default.
    if HW > 128 and N * pl.cdiv(HW, tile) < 2 and _num_tensorcores_per_chip() >= 2:
        tile = _round_up(pl.cdiv(HW, 2), 128)
    return tile


def se_tail_pallas(x67, x64, w1, b1, w2, *, tile_hw=None, out_dtype=jnp.float32):
    """x67: (N,10,1,1), x64: (N,240,H,W) -> (N,40,H,W).  NCHW.

    w1: (240,10[,1,1]) conv2d23.weight ; b1: (240,) ; w2: (40,240[,1,1]).
    x64 / w2 may be bfloat16 (f32 accumulation); gate path stays f32.
    tile_hw=None -> heuristic (full spatial tile on single-TC chips, 2-way
    split on multi-TC chips, VMEM-capped for very large spatial sizes).
    """
    N, C_se = x67.shape[0], x67.shape[1]
    _, C_mid, H, W = x64.shape
    HW = H * W
    C_out = w2.shape[0]

    if tile_hw is None:
        tile_hw = _default_tile_hw(HW, N)
    assert tile_hw == HW or tile_hw % 128 == 0, \
        "tile must be 128-aligned or cover the full spatial extent"

    n_tiles = pl.cdiv(HW, tile_hw)       # ragged last tile is handled by Pallas
    grid = (N, n_tiles)

    # Glue reshapes only (contiguous); the only transpose is the tiny 240x10 w1.
    x67_col = x67.reshape(N, C_se, 1)                    # (N, 10, 1)
    x64_flat = x64.reshape(N, C_mid, HW)                 # (N, 240, HW)
    w1t = w1.reshape(C_mid, C_se).T                      # (10, 240)
    b1_row = b1.reshape(1, C_mid)                        # (1, 240)
    w2_mat = w2.reshape(C_out, C_mid)                    # (40, 240)

    out_itemsize = jnp.dtype(out_dtype).itemsize
    bytes_accessed = int(
        N * C_mid * HW * jnp.dtype(x64.dtype).itemsize        # x64 stream (dominant)
        + N * C_out * HW * out_itemsize                        # output stream
        + C_out * C_mid * jnp.dtype(w2.dtype).itemsize         # w2
        + (C_mid * C_se + C_mid + N * C_se) * 4)               # w1, b1, x67
    cost = pl.CostEstimate(
        flops=2 * N * C_out * C_mid * HW + 2 * N * C_mid * C_se,
        transcendentals=N * C_mid,
        bytes_accessed=bytes_accessed)

    out_flat = pl.pallas_call(
        _se_tail_kernel,
        out_shape=jax.ShapeDtypeStruct((N, C_out, HW), out_dtype),
        grid_spec=pltpu.PrefetchScalarGridSpec(
            num_scalar_prefetch=0,
            grid=grid,
            in_specs=[
                pl.BlockSpec((None, C_se, 1), lambda n, t: (n, 0, 0)),          # x67
                pl.BlockSpec((C_se, C_mid), lambda n, t: (0, 0)),               # w1^T
                pl.BlockSpec((1, C_mid), lambda n, t: (0, 0)),                  # b1
                pl.BlockSpec((None, C_mid, tile_hw), lambda n, t: (n, 0, t)),   # x64
                pl.BlockSpec((C_out, C_mid), lambda n, t: (0, 0)),              # w2
            ],
            out_specs=pl.BlockSpec((None, C_out, tile_hw), lambda n, t: (n, 0, t)),
        ),
        compiler_params=pltpu.CompilerParams(
            dimension_semantics=("parallel", "parallel")),
        cost_estimate=cost,
    )(x67_col, w1t, b1_row, x64_flat, w2_mat)

    # (N, 40, HW) -> (N, 40, H, W): contiguous reshape, no data movement.
    return out_flat.reshape(N, C_out, H, W)


def se_tail_reference(x67, x64, w1, b1, w2):
    """Plain-JAX (f32) reference matching the PyTorch module semantics."""
    N, C_se = x67.shape[0], x67.shape[1]
    C_mid = w1.shape[0]
    C_out = w2.shape[0]
    z = x67.reshape(N, C_se) @ w1.reshape(C_mid, C_se).T + b1.reshape(1, -1)
    gate = jax.nn.sigmoid(z)[:, :, None, None]             # (N, 240, 1, 1)
    gated = gate * x64.astype(jnp.float32)                  # (N, 240, H, W)
    return jnp.einsum("nchw,oc->nohw", gated,
                      w2.reshape(C_out, C_mid).astype(jnp.float32))


if __name__ == "__main__":
    key = jax.random.PRNGKey(0)
    k1, k2, k3, k4, k5 = jax.random.split(key, 5)

    N, H, W = 1, 28, 28
    C_se, C_mid, C_out = 10, 240, 40

    # Inputs (shapes fixed by the module).
    x64 = jax.random.normal(k1, (N, C_mid, H, W), dtype=jnp.float32)
    x67 = jax.random.normal(k2, (N, C_se, 1, 1), dtype=jnp.float32)

    # Deterministic synthetic parameters in native PyTorch (Cout, Cin) layout
    # (both convs are 1x1 so the trailing 1x1 dims are dropped).
    w1 = 0.1 * jax.random.normal(k3, (C_mid, C_se), dtype=jnp.float32)   # conv2d23.weight
    b1 = 0.1 * jax.random.normal(k4, (C_mid,), dtype=jnp.float32)        # conv2d23.bias
    w2 = 0.1 * jax.random.normal(k5, (C_out, C_mid), dtype=jnp.float32)  # conv2d24.weight

    ref = se_tail_reference(x67, x64, w1, b1, w2)

    # 1) Default tiling (single tile per batch on single-TC chips,
    #    spatial split on multi-TC chips).
    out = se_tail_pallas(x67, x64, w1, b1, w2)
    out = jax.block_until_ready(out)
    assert out.shape == (N, C_out, H, W), out.shape
    assert jnp.allclose(out, ref, atol=1e-4, rtol=1e-4), \
        float(jnp.max(jnp.abs(out - ref)))

    # 2) Explicit ragged spatial split (exercises the cdiv / masked-last-tile
    #    path recommended for v7x: 784 = 512 + 272-lane partial tile).
    out_split = se_tail_pallas(x67, x64, w1, b1, w2, tile_hw=512)
    out_split = jax.block_until_ready(out_split)
    assert jnp.allclose(out_split, ref, atol=1e-4, rtol=1e-4), \
        float(jnp.max(jnp.abs(out_split - ref)))

    # 3) bf16 activation/weight stream (f32 accumulate) - halves the dominant
    #    HBM read.  Looser tolerance for the bf16 rounding.
    out_bf16 = se_tail_pallas(x67, x64.astype(jnp.bfloat16), w1, b1,
                              w2.astype(jnp.bfloat16))
    out_bf16 = jax.block_until_ready(out_bf16)
    assert jnp.allclose(out_bf16, ref, atol=5e-2, rtol=5e-2), \
        float(jnp.max(jnp.abs(out_bf16 - ref)))

    print("KERNEL_OK")
</pallas_src>

<mosaic_0001>
module attributes {stable_mosaic.version = 11 : i64} {
  func.func @_se_tail_kernel(%arg0: i32, %arg1: i32, %arg2: memref<1x10x1xf32, #tpu.memory_space<vmem>>, %arg3: memref<10x240xf32, #tpu.memory_space<vmem>>, %arg4: memref<1x240xf32, #tpu.memory_space<vmem>>, %arg5: memref<1x240x784xf32, #tpu.memory_space<vmem>>, %arg6: memref<40x240xf32, #tpu.memory_space<vmem>>, %arg7: memref<1x40x784xf32, #tpu.memory_space<vmem>>) attributes {dimension_semantics = [#tpu.dimension_semantics<parallel>, #tpu.dimension_semantics<parallel>], iteration_bounds = array<i64: 1, 1>, scalar_prefetch = 0 : i64, scratch_operands = 0 : i64, tpu.core_type = #tpu.core_type<tc>, window_params = [{transform_indices = @transform_0, window_bounds = array<i64: 1, 10, 1>}, {pipeline_mode = #tpu.pipeline_mode<synchronous>, transform_indices = @transform_1, window_bounds = array<i64: 10, 240>}, {pipeline_mode = #tpu.pipeline_mode<synchronous>, transform_indices = @transform_2, window_bounds = array<i64: 1, 240>}, {transform_indices = @transform_3, window_bounds = array<i64: 1, 240, 784>}, {pipeline_mode = #tpu.pipeline_mode<synchronous>, transform_indices = @transform_4, window_bounds = array<i64: 40, 240>}, {transform_indices = @transform_5, window_bounds = array<i64: 1, 40, 784>}]} {
    %c0 = arith.constant 0 : index
    %c0_0 = arith.constant 0 : index
    %0 = vector.load %arg3[%c0, %c0_0] : memref<10x240xf32, #tpu.memory_space<vmem>>, vector<10x240xf32>
    %c0_1 = arith.constant 0 : index
    %c0_2 = arith.constant 0 : index
    %c0_3 = arith.constant 0 : index
    %1 = vector.load %arg2[%c0_1, %c0_2, %c0_3] : memref<1x10x1xf32, #tpu.memory_space<vmem>>, vector<1x10x1xf32>
    %2 = vector.shape_cast %1 : vector<1x10x1xf32> to vector<10x1xf32>
    %3 = vector.broadcast %2 : vector<10x1xf32> to vector<10x240xf32>
    %4 = arith.mulf %0, %3 : vector<10x240xf32>
    %cst = arith.constant dense<0.000000e+00> : vector<240xf32>
    %5 = vector.multi_reduction <add>, %4, %cst [0] : vector<10x240xf32> to vector<240xf32>
    %6 = vector.shape_cast %5 : vector<240xf32> to vector<1x240xf32>
    %c0_4 = arith.constant 0 : index
    %c0_5 = arith.constant 0 : index
    %7 = vector.load %arg4[%c0_4, %c0_5] : memref<1x240xf32, #tpu.memory_space<vmem>>, vector<1x240xf32>
    %8 = arith.addf %6, %7 : vector<1x240xf32>
    %9 = arith.negf %8 : vector<1x240xf32>
    %10 = math.exp %9 : vector<1x240xf32>
    %cst_6 = arith.constant 1.000000e+00 : f32
    %11 = vector.broadcast %cst_6 : f32 to vector<1x240xf32>
    %12 = arith.addf %11, %10 : vector<1x240xf32>
    %13 = arith.divf %11, %12 : vector<1x240xf32>
    %c0_7 = arith.constant 0 : index
    %c0_8 = arith.constant 0 : index
    %14 = vector.load %arg6[%c0_7, %c0_8] : memref<40x240xf32, #tpu.memory_space<vmem>>, vector<40x240xf32>
    %15 = vector.broadcast %13 : vector<1x240xf32> to vector<40x240xf32>
    %16 = arith.mulf %14, %15 : vector<40x240xf32>
    %c0_9 = arith.constant 0 : index
    %c0_10 = arith.constant 0 : index
    %c0_11 = arith.constant 0 : index
    %17 = vector.load %arg5[%c0_9, %c0_10, %c0_11] : memref<1x240x784xf32, #tpu.memory_space<vmem>>, vector<1x240x784xf32>
    %18 = vector.shape_cast %17 : vector<1x240x784xf32> to vector<240x784xf32>
    %cst_12 = arith.constant dense<0.000000e+00> : vector<40x784xf32>
    %19 = tpu.matmul %16, %18, %cst_12 {dimension_numbers = #tpu.dot_dimension_numbers<[1], [0], [0], [1], [0, 0, 1, 1], [], []>} : vector<40x240xf32>, vector<240x784xf32>, vector<40x784xf32> -> vector<40x784xf32>
    %c0_13 = arith.constant 0 : index
    %c0_14 = arith.constant 0 : index
    %c0_15 = arith.constant 0 : index
    %20 = vector.load %arg7[%c0_13, %c0_14, %c0_15] : memref<1x40x784xf32, #tpu.memory_space<vmem>>, vector<1x40x784xf32>
    %21 = vector.shape_cast %20 : vector<1x40x784xf32> to vector<40x784xf32>
    %22 = vector.shape_cast %19 : vector<40x784xf32> to vector<1x40x784xf32>
    tpu.vector_store %arg7[%c0_13, %c0_14, %c0_15], %22 {strides = array<i32>} : memref<1x40x784xf32, #tpu.memory_space<vmem>>, vector<1x40x784xf32>,
    return
  }
  func.func @transform_0(%arg0: i32, %arg1: i32) -> (i32, i32, i32) {
    %c0_i32 = arith.constant 0 : i32
    %c0_i32_0 = arith.constant 0 : i32
    %c0_i32_1 = arith.constant 0 : i32
    return %arg0, %c0_i32, %c0_i32_0 : i32, i32, i32
  }
  func.func @transform_1(%arg0: i32, %arg1: i32) -> (i32, i32) {
    %c0_i32 = arith.constant 0 : i32
    %c0_i32_0 = arith.constant 0 : i32
    %c0_i32_1 = arith.constant 0 : i32
    return %c0_i32, %c0_i32_0 : i32, i32
  }
  func.func @transform_2(%arg0: i32, %arg1: i32) -> (i32, i32) {
    %c0_i32 = arith.constant 0 : i32
    %c0_i32_0 = arith.constant 0 : i32
    %c0_i32_1 = arith.constant 0 : i32
    return %c0_i32, %c0_i32_0 : i32, i32
  }
  func.func @transform_3(%arg0: i32, %arg1: i32) -> (i32, i32, i32) {
    %c0_i32 = arith.constant 0 : i32
    %c0_i32_0 = arith.constant 0 : i32
    return %arg0, %c0_i32, %arg1 : i32, i32, i32
  }
  func.func @transform_4(%arg0: i32, %arg1: i32) -> (i32, i32) {
    %c0_i32 = arith.constant 0 : i32
    %c0_i32_0 = arith.constant 0 : i32
    %c0_i32_1 = arith.constant 0 : i32
    return %c0_i32, %c0_i32_0 : i32, i32
  }
  func.func @transform_5(%arg0: i32, %arg1: i32) -> (i32, i32, i32) {
    %c0_i32 = arith.constant 0 : i32
    %c0_i32_0 = arith.constant 0 : i32
    return %arg0, %c0_i32, %arg1 : i32, i32, i32
  }
}

</mosaic_0001>

<llo_original>
// kernel: tpu_custom_call.1
$region0: #{tpu_custom_call.1}
  #allocation0 [shape = 'u32[]', space=smem, size = 0x4, offset = 0x4, fixed_abs, tag = 'smem constant byte address 0x4 - core index']
  #allocation1 [shape = 'u32[72,128]{1,0:T(1,128)}', space=vmem, size = 0x9000, scoped, tag = 'internal scratch']
  %s0 = inlined_call_operand.vmem [shape: f32[1,10,1], index: 0, kind: input, shape index: {}]
  %s1 = inlined_call_operand.vmem [shape: f32[10,240], index: 1, kind: input, shape index: {}]
  %s2 = inlined_call_operand.vmem [shape: f32[1,240], index: 2, kind: input, shape index: {}]
  %s3 = inlined_call_operand.vmem [shape: f32[1,240,784], index: 3, kind: input, shape index: {}]
  %s4 = inlined_call_operand.vmem [shape: f32[40,240], index: 4, kind: input, shape index: {}]
  %s5 = inlined_call_operand.hbm [shape: f32[1,40,784], index: 5, kind: output, shape index: {}]
  %s6 = sld [smem:[#allocation0]]
  $region30: #{tpu_custom_call.1} parent=0
    _
  %s8 = ssub.s32 1, %s6
  %s9 = scalar_select 0, %s8, %s6
  $region1: #{tpu_custom_call.1} parent=0
    #allocation2 [shape = 'u8[143360]{0}', space=vmem, size = 0x23000, scoped, tag = 'output window, operand 0, single buffered']
    #allocation3 [shape = 's32[1]{0}', space=sflag, size = 0x4, scoped, tag = 'scoped memory for tpu_custom_call.1']
    %10 = vsyncpa [#allocation3], 0
    // Predicated region
    $region2: #{tpu_custom_call.1} parent=1 // pred_check
      _
    $region3: #{tpu_custom_call.1} parent=1 // pred_check_branch
      %12 = sbr.rel (0) target = $region5
    $region4: #{tpu_custom_call.1} parent=1 // pred_region
      _
    $region5: #{tpu_custom_call.1} parent=1 // pred_fallthru
      _
    // Predicated region
    $region6: #{tpu_custom_call.1} parent=1 // pred_check
      _
    $region7: #{tpu_custom_call.1} parent=1 // pred_check_branch
      %14 = sbr.rel (0) target = $region9
    $region8: #{tpu_custom_call.1} parent=1 // pred_region
      _
    $region9: #{tpu_custom_call.1} parent=1 // pred_fallthru
      _
    // Predicated region
    $region10: #{tpu_custom_call.1} parent=1 // pred_check
      _
    $region11: #{tpu_custom_call.1} parent=1 // pred_check_branch
      %16 = sbr.rel (0) target = $region13
    $region12: #{tpu_custom_call.1} parent=1 // pred_region
      _
    $region13: #{tpu_custom_call.1} parent=1 // pred_fallthru
      _
    // Predicated region
    $region14: #{tpu_custom_call.1} parent=1 // pred_check
      _
    $region15: #{tpu_custom_call.1} parent=1 // pred_check_branch
      %18 = sbr.rel (0) target = $region17
    $region16: #{tpu_custom_call.1} parent=1 // pred_region
      _
    $region17: #{tpu_custom_call.1} parent=1 // pred_fallthru
      _
    // Predicated region
    $region18: #{tpu_custom_call.1} parent=1 // pred_check
      _
    $region19: #{tpu_custom_call.1} parent=1 // pred_check_branch
      %20 = sbr.rel (0) target = $region21
    $region20: #{tpu_custom_call.1} parent=1 // pred_region
      _
    $region21: #{tpu_custom_call.1} parent=1 // pred_fallthru
      _
    %v21 = vld [vmem:[%s1] sm:$0xff]
    %v22 = vld [vmem:[%s1 + $0x8] sm:$0xff]
    %v23 = vld [vmem:[%s1 + $0x10] sm:$0x3]
    %v24 = vld [vmem:[%s1 + $0x18] sm:$0x3]
    %v25 = vld [vmem:[%s0] sm:$0xff]
    %v26 = vld [vmem:[%s0 + $0x8] sm:$0x3]
    %28 = vset.pattern.permute.xlu0 0
    %29 = vperm.xlu0 %28, %v25
    %v30 = vpop.permute.xlu0 %29
    %33 = vset.pattern.permute.xlu0 0
    %34 = vperm.xlu0 %33, %v26
    %v35 = vpop.permute.xlu0 %34
    %v37 = vmul.f32 %v21, %v30
    %v38 = vmul.f32 %v22, %v30
    %v39 = vmul.f32 %v23, %v35
    %v40 = vmul.f32 %v24, %v35
    %vm41 = vcmask 1041408
    %v42 = vsel %vm41, %v39, 0.0
    %v43 = vadd.f32 %v37, %v42
    %v44 = vrot.slane %v43, 4
    %v45 = vadd.f32 %v43, %v44
    %v46 = vrot.slane %v45, 2
    %v47 = vadd.f32 %v45, %v46
    %v48 = vrot.slane %v47, 1
    %v49 = vadd.f32 %v47, %v48
    %vm50 = vcmask 916480
    %v51 = vsel %vm50, %v38, 0.0
    %vm52 = vcmask 910336
    %v53 = vsel %vm52, %v40, 0.0
    %v54 = vadd.f32 %v51, %v53
    %v55 = vrot.slane %v54, 4
    %v56 = vadd.f32 %v54, %v55
    %v57 = vrot.slane %v56, 2
    %v58 = vadd.f32 %v56, %v57
    %v59 = vrot.slane %v58, 1
    %v60 = vadd.f32 %v58, %v59
    %v61 = vld [vmem:[%s2] sm:$0x3]
    %v63 = vperm.slane %v61, 0
    %v64 = vperm.slane %v61, 1
    %v67 = vadd.f32 %v49, %v63
    %v68 = vadd.f32 %v60, %v64
    %v69 = vxor.u32 %v67, 2147483648
    %v70 = vxor.u32 %v68, 2147483648
    %v71 = vmul.f32 %v69, 1.442695
    %v72 = vpow.pop %v71
    %v73 = vmul.f32 %v70, 1.442695
    %v74 = vpow.pop %v73
    %v75 = vadd.f32 %v72, 1.0
    %v76 = vadd.f32 %v74, 1.0
    %v77 = vrcp.pop %v75
    %v78 = vmul.f32 %v75, %v77
    %v79 = vsub.f32 1.0, %v78
    %v80 = vmul.f32 %v77, %v79
    %v81 = vadd.f32 %v77, %v80
    %vm82 = vweird.f32 %v75
    %vm83 = vweird.f32 %v77
    %vm84 = vmor %vm82, %vm83
    %v85 = vsel %vm84, %v77, %v81
    %v86 = vand.u32 2147483647, %v75
    %vm87 = vcmp.eq.f32.partialorder %v86, 8.507059e+37
    %v88 = vand.u32 %v75, 2147483648
    %v89 = vor.u32 1.1754944e-38, %v88
    %v90 = vsel %vm87, %v89, %v85
    %v91 = vmul.f32 1.0, %v90
    %v92 = vrcp.pop %v76
    %v93 = vmul.f32 %v76, %v92
    %v94 = vsub.f32 1.0, %v93
    %v95 = vmul.f32 %v92, %v94
    %v96 = vadd.f32 %v92, %v95
    %vm97 = vweird.f32 %v76
    %vm98 = vweird.f32 %v92
    %vm99 = vmor %vm97, %vm98
    %v100 = vsel %vm99, %v92, %v96
    %v101 = vand.u32 2147483647, %v76
    %vm102 = vcmp.eq.f32.partialorder %v101, 8.507059e+37
    %v103 = vand.u32 %v76, 2147483648
    %v104 = vor.u32 1.1754944e-38, %v103
    %v105 = vsel %vm102, %v104, %v100
    %v106 = vmul.f32 1.0, %v105
    %v107 = vld [vmem:[%s4] sm:$0xff]
    %v108 = vld [vmem:[%s4 + $0x8] sm:$0xff]
    %v109 = vld [vmem:[%s4 + $0x10] sm:$0xff]
    %v110 = vld [vmem:[%s4 + $0x18] sm:$0xff]
    %v111 = vld [vmem:[%s4 + $0x20] sm:$0xff]
    %v112 = vld [vmem:[%s4 + $0x28] sm:$0xff]
    %v113 = vld [vmem:[%s4 + $0x30] sm:$0xff]
    %v114 = vld [vmem:[%s4 + $0x38] sm:$0xff]
    %v115 = vld [vmem:[%s4 + $0x40] sm:$0xff]
    %v116 = vld [vmem:[%s4 + $0x48] sm:$0xff]
    %v117 = vperm.slane %v91, 0
    %v118 = vperm.slane %v106, 0
    %v119 = vmul.f32 %v107, %v117
    %v120 = vmul.f32 %v108, %v118
    %v121 = vmul.f32 %v109, %v117
    %v122 = vmul.f32 %v110, %v118
    %v123 = vmul.f32 %v111, %v117
    %v124 = vmul.f32 %v112, %v118
    %v125 = vmul.f32 %v113, %v117
    %v126 = vmul.f32 %v114, %v118
    %v127 = vmul.f32 %v115, %v117
    %v128 = vmul.f32 %v116, %v118
    %v129 = vld [vmem:[%s3] sm:$0xff]
    %v130 = vld [vmem:[%s3 + $0x8] sm:$0xff]
    %v131 = vld [vmem:[%s3 + $0x10] sm:$0xff]
    %v132 = vld [vmem:[%s3 + $0x18] sm:$0xff]
    %v133 = vld [vmem:[%s3 + $0x20] sm:$0xff]
    %v134 = vld [vmem:[%s3 + $0x28] sm:$0xff]
    %v135 = vld [vmem:[%s3 + $0x30] sm:$0xff]
    %v136 = vld [vmem:[%s3 + $0x38] sm:$0xff]
    %v137 = vld [vmem:[%s3 + $0x40] sm:$0xff]
    %v138 = vld [vmem:[%s3 + $0x48] sm:$0xff]
    %v139 = vld [vmem:[%s3 + $0x50] sm:$0xff]
    %v140 = vld [vmem:[%s3 + $0x58] sm:$0xff]
    %v141 = vld [vmem:[%s3 + $0x60] sm:$0xff]
    %v142 = vld [vmem:[%s3 + $0x68] sm:$0xff]
    %v143 = vld [vmem:[%s3 + $0x70] sm:$0xff]
    %v144 = vld [vmem:[%s3 + $0x78] sm:$0xff]
    %v145 = vld [vmem:[%s3 + $0x80] sm:$0xff]
    %v146 = vld [vmem:[%s3 + $0x88] sm:$0xff]
    %v147 = vld [vmem:[%s3 + $0x90] sm:$0xff]
    %v148 = vld [vmem:[%s3 + $0x98] sm:$0xff]
    %v149 = vld [vmem:[%s3 + $0xa0] sm:$0xff]
    %v150 = vld [vmem:[%s3 + $0xa8] sm:$0xff]
    %v151 = vld [vmem:[%s3 + $0xb0] sm:$0xff]
    %v152 = vld [vmem:[%s3 + $0xb8] sm:$0xff]
    %v153 = vld [vmem:[%s3 + $0xc0] sm:$0xff]
    %v154 = vld [vmem:[%s3 + $0xc8] sm:$0xff]
    %v155 = vld [vmem:[%s3 + $0xd0] sm:$0xff]
    %v156 = vld [vmem:[%s3 + $0xd8] sm:$0xff]
    %v157 = vld [vmem:[%s3 + $0xe0] sm:$0xff]
    %v158 = vld [vmem:[%s3 + $0xe8] sm:$0xff]
    %v159 = vld [vmem:[%s3 + $0xf0] sm:$0xff]
    %v160 = vld [vmem:[%s3 + $0xf8] sm:$0xff]
    %v161 = vld [vmem:[%s3 + $0x100] sm:$0xff]
    %v162 = vld [vmem:[%s3 + $0x108] sm:$0xff]
    %v163 = vld [vmem:[%s3 + $0x110] sm:$0xff]
    %v164 = vld [vmem:[%s3 + $0x118] sm:$0xff]
    %v165 = vld [vmem:[%s3 + $0x120] sm:$0xff]
    %v166 = vld [vmem:[%s3 + $0x128] sm:$0xff]
    %v167 = vld [vmem:[%s3 + $0x130] sm:$0xff]
    %v168 = vld [vmem:[%s3 + $0x138] sm:$0xff]
    %v169 = vld [vmem:[%s3 + $0x140] sm:$0xff]
    %v170 = vld [vmem:[%s3 + $0x148] sm:$0xff]
    %v171 = vld [vmem:[%s3 + $0x150] sm:$0xff]
    %v172 = vld [vmem:[%s3 + $0x158] sm:$0xff]
    %v173 = vld [vmem:[%s3 + $0x160] sm:$0xff]
    %v174 = vld [vmem:[%s3 + $0x168] sm:$0xff]
    %v175 = vld [vmem:[%s3 + $0x170] sm:$0xff]
    %v176 = vld [vmem:[%s3 + $0x178] sm:$0xff]
    %v177 = vld [vmem:[%s3 + $0x180] sm:$0xff]
    %v178 = vld [vmem:[%s3 + $0x188] sm:$0xff]
    %v179 = vld [vmem:[%s3 + $0x190] sm:$0xff]
    %v180 = vld [vmem:[%s3 + $0x198] sm:$0xff]
    %v181 = vld [vmem:[%s3 + $0x1a0] sm:$0xff]
    %v182 = vld [vmem:[%s3 + $0x1a8] sm:$0xff]
    %v183 = vld [vmem:[%s3 + $0x1b0] sm:$0xff]
    %v184 = vld [vmem:[%s3 + $0x1b8] sm:$0xff]
    %v185 = vld [vmem:[%s3 + $0x1c0] sm:$0xff]
    %v186 = vld [vmem:[%s3 + $0x1c8] sm:$0xff]
    %v187 = vld [vmem:[%s3 + $0x1d0] sm:$0xff]
    %v188 = vld [vmem:[%s3 + $0x1d8] sm:$0xff]
    %v189 = vld [vmem:[%s3 + $0x1e0] sm:$0xff]
    %v190 = vld [vmem:[%s3 + $0x1e8] sm:$0xff]
    %v191 = vld [vmem:[%s3 + $0x1f0] sm:$0xff]
    %v192 = vld [vmem:[%s3 + $0x1f8] sm:$0xff]
    %v193 = vld [vmem:[%s3 + $0x200] sm:$0xff]
    %v194 = vld [vmem:[%s3 + $0x208] sm:$0xff]
    %v195 = vld [vmem:[%s3 + $0x210] sm:$0xff]
    %v196 = vld [vmem:[%s3 + $0x218] sm:$0xff]
    %v197 = vld [vmem:[%s3 + $0x220] sm:$0xff]
    %v198 = vld [vmem:[%s3 + $0x228] sm:$0xff]
    %v199 = vld [vmem:[%s3 + $0x230] sm:$0xff]
    %v200 = vld [vmem:[%s3 + $0x238] sm:$0xff]
    %v201 = vld [vmem:[%s3 + $0x240] sm:$0xff]
    %v202 = vld [vmem:[%s3 + $0x248] sm:$0xff]
    %v203 = vld [vmem:[%s3 + $0x250] sm:$0xff]
    %v204 = vld [vmem:[%s3 + $0x258] sm:$0xff]
    %v205 = vld [vmem:[%s3 + $0x260] sm:$0xff]
    %v206 = vld [vmem:[%s3 + $0x268] sm:$0xff]
    %v207 = vld [vmem:[%s3 + $0x270] sm:$0xff]
    %v208 = vld [vmem:[%s3 + $0x278] sm:$0xff]
    %v209 = vld [vmem:[%s3 + $0x280] sm:$0xff]
    %v210 = vld [vmem:[%s3 + $0x288] sm:$0xff]
    %v211 = vld [vmem:[%s3 + $0x290] sm:$0xff]
    %v212 = vld [vmem:[%s3 + $0x298] sm:$0xff]
    %v213 = vld [vmem:[%s3 + $0x2a0] sm:$0xff]
    %v214 = vld [vmem:[%s3 + $0x2a8] sm:$0xff]
    %v215 = vld [vmem:[%s3 + $0x2b0] sm:$0xff]
    %v216 = vld [vmem:[%s3 + $0x2b8] sm:$0xff]
    %v217 = vld [vmem:[%s3 + $0x2c0] sm:$0xff]
    %v218 = vld [vmem:[%s3 + $0x2c8] sm:$0xff]
    %v219 = vld [vmem:[%s3 + $0x2d0] sm:$0xff]
    %v220 = vld [vmem:[%s3 + $0x2d8] sm:$0xff]
    %v221 = vld [vmem:[%s3 + $0x2e0] sm:$0xff]
    %v222 = vld [vmem:[%s3 + $0x2e8] sm:$0xff]
    %v223 = vld [vmem:[%s3 + $0x2f0] sm:$0xff]
    %v224 = vld [vmem:[%s3 + $0x2f8] sm:$0xff]
    %v225 = vld [vmem:[%s3 + $0x300] sm:$0xff]
    %v226 = vld [vmem:[%s3 + $0x308] sm:$0xff]
    %v227 = vld [vmem:[%s3 + $0x310] sm:$0xff]
    %v228 = vld [vmem:[%s3 + $0x318] sm:$0xff]
    %v229 = vld [vmem:[%s3 + $0x320] sm:$0xff]
    %v230 = vld [vmem:[%s3 + $0x328] sm:$0xff]
    %v231 = vld [vmem:[%s3 + $0x330] sm:$0xff]
    %v232 = vld [vmem:[%s3 + $0x338] sm:$0xff]
    %v233 = vld [vmem:[%s3 + $0x340] sm:$0xff]
    %v234 = vld [vmem:[%s3 + $0x348] sm:$0xff]
    %v235 = vld [vmem:[%s3 + $0x350] sm:$0xff]
    %v236 = vld [vmem:[%s3 + $0x358] sm:$0xff]
    %v237 = vld [vmem:[%s3 + $0x360] sm:$0xff]
    %v238 = vld [vmem:[%s3 + $0x368] sm:$0xff]
    %v239 = vld [vmem:[%s3 + $0x370] sm:$0xff]
    %v240 = vld [vmem:[%s3 + $0x378] sm:$0xff]
    %v241 = vld [vmem:[%s3 + $0x380] sm:$0xff]
    %v242 = vld [vmem:[%s3 + $0x388] sm:$0xff]
    %v243 = vld [vmem:[%s3 + $0x390] sm:$0xff]
    %v244 = vld [vmem:[%s3 + $0x398] sm:$0xff]
    %v245 = vld [vmem:[%s3 + $0x3a0] sm:$0xff]
    %v246 = vld [vmem:[%s3 + $0x3a8] sm:$0xff]
    %v247 = vld [vmem:[%s3 + $0x3b0] sm:$0xff]
    %v248 = vld [vmem:[%s3 + $0x3b8] sm:$0xff]
    %v249 = vld [vmem:[%s3 + $0x3c0] sm:$0xff]
    %v250 = vld [vmem:[%s3 + $0x3c8] sm:$0xff]
    %v251 = vld [vmem:[%s3 + $0x3d0] sm:$0xff]
    %v252 = vld [vmem:[%s3 + $0x3d8] sm:$0xff]
    %v253 = vld [vmem:[%s3 + $0x3e0] sm:$0xff]
    %v254 = vld [vmem:[%s3 + $0x3e8] sm:$0xff]
    %v255 = vld [vmem:[%s3 + $0x3f0] sm:$0xff]
    %v256 = vld [vmem:[%s3 + $0x3f8] sm:$0xff]
    %v257 = vld [vmem:[%s3 + $0x400] sm:$0xff]
    %v258 = vld [vmem:[%s3 + $0x408] sm:$0xff]
    %v259 = vld [vmem:[%s3 + $0x410] sm:$0xff]
    %v260 = vld [vmem:[%s3 + $0x418] sm:$0xff]
    %v261 = vld [vmem:[%s3 + $0x420] sm:$0xff]
    %v262 = vld [vmem:[%s3 + $0x428] sm:$0xff]
    %v263 = vld [vmem:[%s3 + $0x430] sm:$0xff]
    %v264 = vld [vmem:[%s3 + $0x438] sm:$0xff]
    %v265 = vld [vmem:[%s3 + $0x440] sm:$0xff]
    %v266 = vld [vmem:[%s3 + $0x448] sm:$0xff]
    %v267 = vld [vmem:[%s3 + $0x450] sm:$0xff]
    %v268 = vld [vmem:[%s3 + $0x458] sm:$0xff]
    %v269 = vld [vmem:[%s3 + $0x460] sm:$0xff]
    %v270 = vld [vmem:[%s3 + $0x468] sm:$0xff]
    %v271 = vld [vmem:[%s3 + $0x470] sm:$0xff]
    %v272 = vld [vmem:[%s3 + $0x478] sm:$0xff]
    %v273 = vld [vmem:[%s3 + $0x480] sm:$0xff]
    %v274 = vld [vmem:[%s3 + $0x488] sm:$0xff]
    %v275 = vld [vmem:[%s3 + $0x490] sm:$0xff]
    %v276 = vld [vmem:[%s3 + $0x498] sm:$0xff]
    %v277 = vld [vmem:[%s3 + $0x4a0] sm:$0xff]
    %v278 = vld [vmem:[%s3 + $0x4a8] sm:$0xff]
    %v279 = vld [vmem:[%s3 + $0x4b0] sm:$0xff]
    %v280 = vld [vmem:[%s3 + $0x4b8] sm:$0xff]
    %v281 = vld [vmem:[%s3 + $0x4c0] sm:$0xff]
    %v282 = vld [vmem:[%s3 + $0x4c8] sm:$0xff]
    %v283 = vld [vmem:[%s3 + $0x4d0] sm:$0xff]
    %v284 = vld [vmem:[%s3 + $0x4d8] sm:$0xff]
    %v285 = vld [vmem:[%s3 + $0x4e0] sm:$0xff]
    %v286 = vld [vmem:[%s3 + $0x4e8] sm:$0xff]
    %v287 = vld [vmem:[%s3 + $0x4f0] sm:$0xff]
    %v288 = vld [vmem:[%s3 + $0x4f8] sm:$0xff]
    %v289 = vld [vmem:[%s3 + $0x500] sm:$0xff]
    %v290 = vld [vmem:[%s3 + $0x508] sm:$0xff]
    %v291 = vld [vmem:[%s3 + $0x510] sm:$0xff]
    %v292 = vld [vmem:[%s3 + $0x518] sm:$0xff]
    %v293 = vld [vmem:[%s3 + $0x520] sm:$0xff]
    %v294 = vld [vmem:[%s3 + $0x528] sm:$0xff]
    %v295 = vld [vmem:[%s3 + $0x530] sm:$0xff]
    %v296 = vld [vmem:[%s3 + $0x538] sm:$0xff]
    %v297 = vld [vmem:[%s3 + $0x540] sm:$0xff]
    %v298 = vld [vmem:[%s3 + $0x548] sm:$0xff]
    %v299 = vld [vmem:[%s3 + $0x550] sm:$0xff]
    %v300 = vld [vmem:[%s3 + $0x558] sm:$0xff]
    %v301 = vld [vmem:[%s3 + $0x560] sm:$0xff]
    %v302 = vld [vmem:[%s3 + $0x568] sm:$0xff]
    %v303 = vld [vmem:[%s3 + $0x570] sm:$0xff]
    %v304 = vld [vmem:[%s3 + $0x578] sm:$0xff]
    %v305 = vld [vmem:[%s3 + $0x580] sm:$0xff]
    %v306 = vld [vmem:[%s3 + $0x588] sm:$0xff]
    %v307 = vld [vmem:[%s3 + $0x590] sm:$0xff]
    %v308 = vld [vmem:[%s3 + $0x598] sm:$0xff]
    %v309 = vld [vmem:[%s3 + $0x5a0] sm:$0xff]
    %v310 = vld [vmem:[%s3 + $0x5a8] sm:$0xff]
    %v311 = vld [vmem:[%s3 + $0x5b0] sm:$0xff]
    %v312 = vld [vmem:[%s3 + $0x5b8] sm:$0xff]
    %v313 = vld [vmem:[%s3 + $0x5c0] sm:$0xff]
    %v314 = vld [vmem:[%s3 + $0x5c8] sm:$0xff]
    %v315 = vld [vmem:[%s3 + $0x5d0] sm:$0xff]
    %v316 = vld [vmem:[%s3 + $0x5d8] sm:$0xff]
    %v317 = vld [vmem:[%s3 + $0x5e0] sm:$0xff]
    %v318 = vld [vmem:[%s3 + $0x5e8] sm:$0xff]
    %v319 = vld [vmem:[%s3 + $0x5f0] sm:$0xff]
    %v320 = vld [vmem:[%s3 + $0x5f8] sm:$0xff]
    %v321 = vld [vmem:[%s3 + $0x600] sm:$0xff]
    %v322 = vld [vmem:[%s3 + $0x608] sm:$0xff]
    %v323 = vld [vmem:[%s3 + $0x610] sm:$0xff]
    %v324 = vld [vmem:[%s3 + $0x618] sm:$0xff]
    %v325 = vld [vmem:[%s3 + $0x620] sm:$0xff]
    %v326 = vld [vmem:[%s3 + $0x628] sm:$0xff]
    %v327 = vld [vmem:[%s3 + $0x630] sm:$0xff]
    %v328 = vld [vmem:[%s3 + $0x638] sm:$0xff]
    %v329 = vld [vmem:[%s3 + $0x640] sm:$0xff]
    %v330 = vld [vmem:[%s3 + $0x648] sm:$0xff]
    %v331 = vld [vmem:[%s3 + $0x650] sm:$0xff]
    %v332 = vld [vmem:[%s3 + $0x658] sm:$0xff]
    %v333 = vld [vmem:[%s3 + $0x660] sm:$0xff]
    %v334 = vld [vmem:[%s3 + $0x668] sm:$0xff]
    %v335 = vld [vmem:[%s3 + $0x670] sm:$0xff]
    %v336 = vld [vmem:[%s3 + $0x678] sm:$0xff]
    %v337 = vld [vmem:[%s3 + $0x680] sm:$0xff]
    %v338 = vld [vmem:[%s3 + $0x688] sm:$0xff]
    %v340 = vsel %vm50, %v120, 0
    %v343 = vsel %vm50, %v122, 0
    %v346 = vsel %vm50, %v124, 0
    %v349 = vsel %vm50, %v126, 0
    %v352 = vsel %vm50, %v128, 0
    %354 = vmatpush.msra.mxu0 %v234
    %355 = vmatpush.msra.mxu0 %v227
    %356 = vmatpush.msra.mxu0 %v220
    %357 = vmatpush.msra.mxu0 %v213
    %358 = vmatpush.msra.mxu0 %v206
    %359 = vmatpush.msra.mxu0 %v199
    %360 = vmatpush.msra.mxu0 %v192
    %361 = vmatpush.msra.mxu0 %v185
    %362 = vmatpush.msra.mxu0 %v178
    %363 = vmatpush.msra.mxu0 %v171
    %364 = vmatpush.msra.mxu0 %v164
    %365 = vmatpush.msra.mxu0 %v157
    %366 = vmatpush.msra.mxu0 %v150
    %367 = vmatpush.msra.mxu0 %v143
    %368 = vmatpush.msra.mxu0 %v136
    %369 = vmatpush.msra.mxu0 %v129
    %370 = vmatmul.f32.gmra.mxu0 %v119
    %v371 = vpop.f32.mrf.mxu0
    %v372 = vadd.f32 0.0, %v371
    %373 = vmatmul.f32.gmra.mxu0 %v121
    %v374 = vpop.f32.mrf.mxu0
    %v375 = vadd.f32 0.0, %v374
    %376 = vmatmul.f32.gmra.mxu0 %v123
    %v377 = vpop.f32.mrf.mxu0
    %v378 = vadd.f32 0.0, %v377
    %379 = vmatmul.f32.gmra.mxu0 %v125
    %v380 = vpop.f32.mrf.mxu0
    %v381 = vadd.f32 0.0, %v380
    %382 = vmatmul.f32.gmra.mxu0 %v127
    %v383 = vpop.f32.mrf.mxu0
    %v384 = vadd.f32 0.0, %v383
    %385 = vdwg.mxu0
    %386 = vmatpush.msra.mxu0 0.0
    %387 = vmatpush.msra.mxu0 0.0
    %388 = vmatpush.msra.mxu0 %v332
    %389 = vmatpush.msra.mxu0 %v325
    %390 = vmatpush.msra.mxu0 %v318
    %391 = vmatpush.msra.mxu0 %v311
    %392 = vmatpush.msra.mxu0 %v304
    %393 = vmatpush.msra.mxu0 %v297
    %394 = vmatpush.msra.mxu0 %v290
    %395 = vmatpush.msra.mxu0 %v283
    %396 = vmatpush.msra.mxu0 %v276
    %397 = vmatpush.msra.mxu0 %v269
    %398 = vmatpush.msra.mxu0 %v262
    %399 = vmatpush.msra.mxu0 %v255
    %400 = vmatpush.msra.mxu0 %v248
    %401 = vmatpush.msra.mxu0 %v241
    %402 = vmatmul.f32.gmra.mxu0 %v340
    %v403 = vpop.f32.mrf.mxu0
    %v404 = vadd.f32 %v372, %v403
    %405 = vmatmul.f32.gmra.mxu0 %v343
    %v406 = vpop.f32.mrf.mxu0
    %v407 = vadd.f32 %v375, %v406
    %408 = vmatmul.f32.gmra.mxu0 %v346
    %v409 = vpop.f32.mrf.mxu0
    %v410 = vadd.f32 %v378, %v409
    %411 = vmatmul.f32.gmra.mxu0 %v349
    %v412 = vpop.f32.mrf.mxu0
    %v413 = vadd.f32 %v381, %v412
    %414 = vmatmul.f32.gmra.mxu0 %v352
    %v415 = vpop.f32.mrf.mxu0
    %v416 = vadd.f32 %v384, %v415
    %417 = vdwg.mxu0
    %418 = vmatpush.msra.mxu0 %v235
    %419 = vmatpush.msra.mxu0 %v228
    %420 = vmatpush.msra.mxu0 %v221
    %421 = vmatpush.msra.mxu0 %v214
    %422 = vmatpush.msra.mxu0 %v207
    %423 = vmatpush.msra.mxu0 %v200
    %424 = vmatpush.msra.mxu0 %v193
    %425 = vmatpush.msra.mxu0 %v186
    %426 = vmatpush.msra.mxu0 %v179
    %427 = vmatpush.msra.mxu0 %v172
    %428 = vmatpush.msra.mxu0 %v165
    %429 = vmatpush.msra.mxu0 %v158
    %430 = vmatpush.msra.mxu0 %v151
    %431 = vmatpush.msra.mxu0 %v144
    %432 = vmatpush.msra.mxu0 %v137
    %433 = vmatpush.msra.mxu0 %v130
    %434 = vmatmul.f32.gmra.mxu0 %v119
    %v435 = vpop.f32.mrf.mxu0
    %v436 = vadd.f32 0.0, %v435
    %437 = vmatmul.f32.gmra.mxu0 %v121
    %v438 = vpop.f32.mrf.mxu0
    %v439 = vadd.f32 0.0, %v438
    %440 = vmatmul.f32.gmra.mxu0 %v123
    %v441 = vpop.f32.mrf.mxu0
    %v442 = vadd.f32 0.0, %v441
    %443 = vmatmul.f32.gmra.mxu0 %v125
    %v444 = vpop.f32.mrf.mxu0
    %v445 = vadd.f32 0.0, %v444
    %446 = vmatmul.f32.gmra.mxu0 %v127
    %v447 = vpop.f32.mrf.mxu0
    %v448 = vadd.f32 0.0, %v447
    %449 = vdwg.mxu0
    %450 = vmatpush.msra.mxu0 0.0
    %451 = vmatpush.msra.mxu0 0.0
    %452 = vmatpush.msra.mxu0 %v333
    %453 = vmatpush.msra.mxu0 %v326
    %454 = vmatpush.msra.mxu0 %v319
    %455 = vmatpush.msra.mxu0 %v312
    %456 = vmatpush.msra.mxu0 %v305
    %457 = vmatpush.msra.mxu0 %v298
    %458 = vmatpush.msra.mxu0 %v291
    %459 = vmatpush.msra.mxu0 %v284
    %460 = vmatpush.msra.mxu0 %v277
    %461 = vmatpush.msra.mxu0 %v270
    %462 = vmatpush.msra.mxu0 %v263
    %463 = vmatpush.msra.mxu0 %v256
    %464 = vmatpush.msra.mxu0 %v249
    %465 = vmatpush.msra.mxu0 %v242
    %466 = vmatmul.f32.gmra.mxu0 %v340
    %v467 = vpop.f32.mrf.mxu0
    %v468 = vadd.f32 %v436, %v467
    %469 = vmatmul.f32.gmra.mxu0 %v343
    %v470 = vpop.f32.mrf.mxu0
    %v471 = vadd.f32 %v439, %v470
    %472 = vmatmul.f32.gmra.mxu0 %v346
    %v473 = vpop.f32.mrf.mxu0
    %v474 = vadd.f32 %v442, %v473
    %475 = vmatmul.f32.gmra.mxu0 %v349
    %v476 = vpop.f32.mrf.mxu0
    %v477 = vadd.f32 %v445, %v476
    %478 = vmatmul.f32.gmra.mxu0 %v352
    %v479 = vpop.f32.mrf.mxu0
    %v480 = vadd.f32 %v448, %v479
    %481 = vdwg.mxu0
    %482 = vmatpush.msra.mxu0 %v236
    %483 = vmatpush.msra.mxu0 %v229
    %484 = vmatpush.msra.mxu0 %v222
    %485 = vmatpush.msra.mxu0 %v215
    %486 = vmatpush.msra.mxu0 %v208
    %487 = vmatpush.msra.mxu0 %v201
    %488 = vmatpush.msra.mxu0 %v194
    %489 = vmatpush.msra.mxu0 %v187
    %490 = vmatpush.msra.mxu0 %v180
    %491 = vmatpush.msra.mxu0 %v173
    %492 = vmatpush.msra.mxu0 %v166
    %493 = vmatpush.msra.mxu0 %v159
    %494 = vmatpush.msra.mxu0 %v152
    %495 = vmatpush.msra.mxu0 %v145
    %496 = vmatpush.msra.mxu0 %v138
    %497 = vmatpush.msra.mxu0 %v131
    %498 = vmatmul.f32.gmra.mxu0 %v119
    %v499 = vpop.f32.mrf.mxu0
    %v500 = vadd.f32 0.0, %v499
    %501 = vmatmul.f32.gmra.mxu0 %v121
    %v502 = vpop.f32.mrf.mxu0
    %v503 = vadd.f32 0.0, %v502
    %504 = vmatmul.f32.gmra.mxu0 %v123
    %v505 = vpop.f32.mrf.mxu0
    %v506 = vadd.f32 0.0, %v505
    %507 = vmatmul.f32.gmra.mxu0 %v125
    %v508 = vpop.f32.mrf.mxu0
    %v509 = vadd.f32 0.0, %v508
    %510 = vmatmul.f32.gmra.mxu0 %v127
    %v511 = vpop.f32.mrf.mxu0
    %v512 = vadd.f32 0.0, %v511
    %513 = vdwg.mxu0
    %514 = vmatpush.msra.mxu0 0.0
    %515 = vmatpush.msra.mxu0 0.0
    %516 = vmatpush.msra.mxu0 %v334
    %517 = vmatpush.msra.mxu0 %v327
    %518 = vmatpush.msra.mxu0 %v320
    %519 = vmatpush.msra.mxu0 %v313
    %520 = vmatpush.msra.mxu0 %v306
    %521 = vmatpush.msra.mxu0 %v299
    %522 = vmatpush.msra.mxu0 %v292
    %523 = vmatpush.msra.mxu0 %v285
    %524 = vmatpush.msra.mxu0 %v278
    %525 = vmatpush.msra.mxu0 %v271
    %526 = vmatpush.msra.mxu0 %v264
    %527 = vmatpush.msra.mxu0 %v257
    %528 = vmatpush.msra.mxu0 %v250
    %529 = vmatpush.msra.mxu0 %v243
    %530 = vmatmul.f32.gmra.mxu0 %v340
    %v531 = vpop.f32.mrf.mxu0
    %v532 = vadd.f32 %v500, %v531
    %533 = vmatmul.f32.gmra.mxu0 %v343
    %v534 = vpop.f32.mrf.mxu0
    %v535 = vadd.f32 %v503, %v534
    %536 = vmatmul.f32.gmra.mxu0 %v346
    %v537 = vpop.f32.mrf.mxu0
    %v538 = vadd.f32 %v506, %v537
    %539 = vmatmul.f32.gmra.mxu0 %v349
    %v540 = vpop.f32.mrf.mxu0
    %v541 = vadd.f32 %v509, %v540
    %542 = vmatmul.f32.gmra.mxu0 %v352
    %v543 = vpop.f32.mrf.mxu0
    %v544 = vadd.f32 %v512, %v543
    %545 = vdwg.mxu0
    %546 = vmatpush.msra.mxu0 %v237
    %547 = vmatpush.msra.mxu0 %v230
    %548 = vmatpush.msra.mxu0 %v223
    %549 = vmatpush.msra.mxu0 %v216
    %550 = vmatpush.msra.mxu0 %v209
    %551 = vmatpush.msra.mxu0 %v202
    %552 = vmatpush.msra.mxu0 %v195
    %553 = vmatpush.msra.mxu0 %v188
    %554 = vmatpush.msra.mxu0 %v181
    %555 = vmatpush.msra.mxu0 %v174
    %556 = vmatpush.msra.mxu0 %v167
    %557 = vmatpush.msra.mxu0 %v160
    %558 = vmatpush.msra.mxu0 %v153
    %559 = vmatpush.msra.mxu0 %v146
    %560 = vmatpush.msra.mxu0 %v139
    %561 = vmatpush.msra.mxu0 %v132
    %562 = vmatmul.f32.gmra.mxu0 %v119
    %v563 = vpop.f32.mrf.mxu0
    %v564 = vadd.f32 0.0, %v563
    %565 = vmatmul.f32.gmra.mxu0 %v121
    %v566 = vpop.f32.mrf.mxu0
    %v567 = vadd.f32 0.0, %v566
    %568 = vmatmul.f32.gmra.mxu0 %v123
    %v569 = vpop.f32.mrf.mxu0
    %v570 = vadd.f32 0.0, %v569
    %571 = vmatmul.f32.gmra.mxu0 %v125
    %v572 = vpop.f32.mrf.mxu0
    %v573 = vadd.f32 0.0, %v572
    %574 = vmatmul.f32.gmra.mxu0 %v127
    %v575 = vpop.f32.mrf.mxu0
    %v576 = vadd.f32 0.0, %v575
    %577 = vdwg.mxu0
    %578 = vmatpush.msra.mxu0 0.0
    %579 = vmatpush.msra.mxu0 0.0
    %580 = vmatpush.msra.mxu0 %v335
    %581 = vmatpush.msra.mxu0 %v328
    %582 = vmatpush.msra.mxu0 %v321
    %583 = vmatpush.msra.mxu0 %v314
    %584 = vmatpush.msra.mxu0 %v307
    %585 = vmatpush.msra.mxu0 %v300
    %586 = vmatpush.msra.mxu0 %v293
    %587 = vmatpush.msra.mxu0 %v286
    %588 = vmatpush.msra.mxu0 %v279
    %589 = vmatpush.msra.mxu0 %v272
    %590 = vmatpush.msra.mxu0 %v265
    %591 = vmatpush.msra.mxu0 %v258
    %592 = vmatpush.msra.mxu0 %v251
    %593 = vmatpush.msra.mxu0 %v244
    %594 = vmatmul.f32.gmra.mxu0 %v340
    %v595 = vpop.f32.mrf.mxu0
    %v596 = vadd.f32 %v564, %v595
    %597 = vmatmul.f32.gmra.mxu0 %v343
    %v598 = vpop.f32.mrf.mxu0
    %v599 = vadd.f32 %v567, %v598
    %600 = vmatmul.f32.gmra.mxu0 %v346
    %v601 = vpop.f32.mrf.mxu0
    %v602 = vadd.f32 %v570, %v601
    %603 = vmatmul.f32.gmra.mxu0 %v349
    %v604 = vpop.f32.mrf.mxu0
    %v605 = vadd.f32 %v573, %v604
    %606 = vmatmul.f32.gmra.mxu0 %v352
    %v607 = vpop.f32.mrf.mxu0
    %v608 = vadd.f32 %v576, %v607
    %609 = vdwg.mxu0
    %610 = vmatpush.msra.mxu0 %v238
    %611 = vmatpush.msra.mxu0 %v231
    %612 = vmatpush.msra.mxu0 %v224
    %613 = vmatpush.msra.mxu0 %v217
    %614 = vmatpush.msra.mxu0 %v210
    %615 = vmatpush.msra.mxu0 %v203
    %616 = vmatpush.msra.mxu0 %v196
    %617 = vmatpush.msra.mxu0 %v189
    %618 = vmatpush.msra.mxu0 %v182
    %619 = vmatpush.msra.mxu0 %v175
    %620 = vmatpush.msra.mxu0 %v168
    %621 = vmatpush.msra.mxu0 %v161
    %622 = vmatpush.msra.mxu0 %v154
    %623 = vmatpush.msra.mxu0 %v147
    %624 = vmatpush.msra.mxu0 %v140
    %625 = vmatpush.msra.mxu0 %v133
    %626 = vmatmul.f32.gmra.mxu0 %v119
    %v627 = vpop.f32.mrf.mxu0
    %v628 = vadd.f32 0.0, %v627
    %629 = vmatmul.f32.gmra.mxu0 %v121
    %v630 = vpop.f32.mrf.mxu0
    %v631 = vadd.f32 0.0, %v630
    %632 = vmatmul.f32.gmra.mxu0 %v123
    %v633 = vpop.f32.mrf.mxu0
    %v634 = vadd.f32 0.0, %v633
    %635 = vmatmul.f32.gmra.mxu0 %v125
    %v636 = vpop.f32.mrf.mxu0
    %v637 = vadd.f32 0.0, %v636
    %638 = vmatmul.f32.gmra.mxu0 %v127
    %v639 = vpop.f32.mrf.mxu0
    %v640 = vadd.f32 0.0, %v639
    %641 = vdwg.mxu0
    %642 = vmatpush.msra.mxu0 0.0
    %643 = vmatpush.msra.mxu0 0.0
    %644 = vmatpush.msra.mxu0 %v336
    %645 = vmatpush.msra.mxu0 %v329
    %646 = vmatpush.msra.mxu0 %v322
    %647 = vmatpush.msra.mxu0 %v315
    %648 = vmatpush.msra.mxu0 %v308
    %649 = vmatpush.msra.mxu0 %v301
    %650 = vmatpush.msra.mxu0 %v294
    %651 = vmatpush.msra.mxu0 %v287
    %652 = vmatpush.msra.mxu0 %v280
    %653 = vmatpush.msra.mxu0 %v273
    %654 = vmatpush.msra.mxu0 %v266
    %655 = vmatpush.msra.mxu0 %v259
    %656 = vmatpush.msra.mxu0 %v252
    %657 = vmatpush.msra.mxu0 %v245
    %658 = vmatmul.f32.gmra.mxu0 %v340
    %v659 = vpop.f32.mrf.mxu0
    %v660 = vadd.f32 %v628, %v659
    %661 = vmatmul.f32.gmra.mxu0 %v343
    %v662 = vpop.f32.mrf.mxu0
    %v663 = vadd.f32 %v631, %v662
    %664 = vmatmul.f32.gmra.mxu0 %v346
    %v665 = vpop.f32.mrf.mxu0
    %v666 = vadd.f32 %v634, %v665
    %667 = vmatmul.f32.gmra.mxu0 %v349
    %v668 = vpop.f32.mrf.mxu0
    %v669 = vadd.f32 %v637, %v668
    %670 = vmatmul.f32.gmra.mxu0 %v352
    %v671 = vpop.f32.mrf.mxu0
    %v672 = vadd.f32 %v640, %v671
    %673 = vdwg.mxu0
    %674 = vmatpush.msra.mxu0 %v239
    %675 = vmatpush.msra.mxu0 %v232
    %676 = vmatpush.msra.mxu0 %v225
    %677 = vmatpush.msra.mxu0 %v218
    %678 = vmatpush.msra.mxu0 %v211
    %679 = vmatpush.msra.mxu0 %v204
    %680 = vmatpush.msra.mxu0 %v197
    %681 = vmatpush.msra.mxu0 %v190
    %682 = vmatpush.msra.mxu0 %v183
    %683 = vmatpush.msra.mxu0 %v176
    %684 = vmatpush.msra.mxu0 %v169
    %685 = vmatpush.msra.mxu0 %v162
    %686 = vmatpush.msra.mxu0 %v155
    %687 = vmatpush.msra.mxu0 %v148
    %688 = vmatpush.msra.mxu0 %v141
    %689 = vmatpush.msra.mxu0 %v134
    %690 = vmatmul.f32.gmra.mxu0 %v119
    %v691 = vpop.f32.mrf.mxu0
    %v692 = vadd.f32 0.0, %v691
    %693 = vmatmul.f32.gmra.mxu0 %v121
    %v694 = vpop.f32.mrf.mxu0
    %v695 = vadd.f32 0.0, %v694
    %696 = vmatmul.f32.gmra.mxu0 %v123
    %v697 = vpop.f32.mrf.mxu0
    %v698 = vadd.f32 0.0, %v697
    %699 = vmatmul.f32.gmra.mxu0 %v125
    %v700 = vpop.f32.mrf.mxu0
    %v701 = vadd.f32 0.0, %v700
    %702 = vmatmul.f32.gmra.mxu0 %v127
    %v703 = vpop.f32.mrf.mxu0
    %v704 = vadd.f32 0.0, %v703
    %705 = vdwg.mxu0
    %706 = vmatpush.msra.mxu0 0.0
    %707 = vmatpush.msra.mxu0 0.0
    %708 = vmatpush.msra.mxu0 %v337
    %709 = vmatpush.msra.mxu0 %v330
    %710 = vmatpush.msra.mxu0 %v323
    %711 = vmatpush.msra.mxu0 %v316
    %712 = vmatpush.msra.mxu0 %v309
    %713 = vmatpush.msra.mxu0 %v302
    %714 = vmatpush.msra.mxu0 %v295
    %715 = vmatpush.msra.mxu0 %v288
    %716 = vmatpush.msra.mxu0 %v281
    %717 = vmatpush.msra.mxu0 %v274
    %718 = vmatpush.msra.mxu0 %v267
    %719 = vmatpush.msra.mxu0 %v260
    %720 = vmatpush.msra.mxu0 %v253
    %721 = vmatpush.msra.mxu0 %v246
    %722 = vmatmul.f32.gmra.mxu0 %v340
    %v723 = vpop.f32.mrf.mxu0
    %v724 = vadd.f32 %v692, %v723
    %725 = vmatmul.f32.gmra.mxu0 %v343
    %v726 = vpop.f32.mrf.mxu0
    %v727 = vadd.f32 %v695, %v726
    %728 = vmatmul.f32.gmra.mxu0 %v346
    %v729 = vpop.f32.mrf.mxu0
    %v730 = vadd.f32 %v698, %v729
    %731 = vmatmul.f32.gmra.mxu0 %v349
    %v732 = vpop.f32.mrf.mxu0
    %v733 = vadd.f32 %v701, %v732
    %734 = vmatmul.f32.gmra.mxu0 %v352
    %v735 = vpop.f32.mrf.mxu0
    %v736 = vadd.f32 %v704, %v735
    %737 = vdwg.mxu0
    %738 = vmatpush.msra.mxu0 %v240
    %739 = vmatpush.msra.mxu0 %v233
    %740 = vmatpush.msra.mxu0 %v226
    %741 = vmatpush.msra.mxu0 %v219
    %742 = vmatpush.msra.mxu0 %v212
    %743 = vmatpush.msra.mxu0 %v205
    %744 = vmatpush.msra.mxu0 %v198
    %745 = vmatpush.msra.mxu0 %v191
    %746 = vmatpush.msra.mxu0 %v184
    %747 = vmatpush.msra.mxu0 %v177
    %748 = vmatpush.msra.mxu0 %v170
    %749 = vmatpush.msra.mxu0 %v163
    %750 = vmatpush.msra.mxu0 %v156
    %751 = vmatpush.msra.mxu0 %v149
    %752 = vmatpush.msra.mxu0 %v142
    %753 = vmatpush.msra.mxu0 %v135
    %754 = vmatmul.f32.gmra.mxu0 %v119
    %v755 = vpop.f32.mrf.mxu0
    %v756 = vadd.f32 0.0, %v755
    %757 = vmatmul.f32.gmra.mxu0 %v121
    %v758 = vpop.f32.mrf.mxu0
    %v759 = vadd.f32 0.0, %v758
    %760 = vmatmul.f32.gmra.mxu0 %v123
    %v761 = vpop.f32.mrf.mxu0
    %v762 = vadd.f32 0.0, %v761
    %763 = vmatmul.f32.gmra.mxu0 %v125
    %v764 = vpop.f32.mrf.mxu0
    %v765 = vadd.f32 0.0, %v764
    %766 = vmatmul.f32.gmra.mxu0 %v127
    %v767 = vpop.f32.mrf.mxu0
    %v768 = vadd.f32 0.0, %v767
    %769 = vdwg.mxu0
    %770 = vmatpush.msra.mxu0 0.0
    %771 = vmatpush.msra.mxu0 0.0
    %772 = vmatpush.msra.mxu0 %v338
    %773 = vmatpush.msra.mxu0 %v331
    %774 = vmatpush.msra.mxu0 %v324
    %775 = vmatpush.msra.mxu0 %v317
    %776 = vmatpush.msra.mxu0 %v310
    %777 = vmatpush.msra.mxu0 %v303
    %778 = vmatpush.msra.mxu0 %v296
    %779 = vmatpush.msra.mxu0 %v289
    %780 = vmatpush.msra.mxu0 %v282
    %781 = vmatpush.msra.mxu0 %v275
    %782 = vmatpush.msra.mxu0 %v268
    %783 = vmatpush.msra.mxu0 %v261
    %784 = vmatpush.msra.mxu0 %v254
    %785 = vmatpush.msra.mxu0 %v247
    %786 = vmatmul.f32.gmra.mxu0 %v340
    %v787 = vpop.f32.mrf.mxu0
    %v788 = vadd.f32 %v756, %v787
    %789 = vmatmul.f32.gmra.mxu0 %v343
    %v790 = vpop.f32.mrf.mxu0
    %v791 = vadd.f32 %v759, %v790
    %792 = vmatmul.f32.gmra.mxu0 %v346
    %v793 = vpop.f32.mrf.mxu0
    %v794 = vadd.f32 %v762, %v793
    %795 = vmatmul.f32.gmra.mxu0 %v349
    %v796 = vpop.f32.mrf.mxu0
    %v797 = vadd.f32 %v765, %v796
    %798 = vmatmul.f32.gmra.mxu0 %v352
    %v799 = vpop.f32.mrf.mxu0
    %v800 = vadd.f32 %v768, %v799
    %801 = vdwg.mxu0
    %802 = vst [vmem:[#allocation2] sm:$0xff] %v404
    %803 = vst [vmem:[#allocation2 + $0x8] sm:$0xff] %v468
    %804 = vst [vmem:[#allocation2 + $0x10] sm:$0xff] %v532
    %805 = vst [vmem:[#allocation2 + $0x18] sm:$0xff] %v596
    %806 = vst [vmem:[#allocation2 + $0x20] sm:$0xff] %v660
    %807 = vst [vmem:[#allocation2 + $0x28] sm:$0xff] %v724
    %vm808 = vcmask 130048
    %809 = vst.msk [vmem:[#allocation2 + $0x30] sm:$0xff] %vm808, %v788
    %810 = vst [vmem:[#allocation2 + $0x38] sm:$0xff] %v407
    %811 = vst [vmem:[#allocation2 + $0x40] sm:$0xff] %v471
    %812 = vst [vmem:[#allocation2 + $0x48] sm:$0xff] %v535
    %813 = vst [vmem:[#allocation2 + $0x50] sm:$0xff] %v599
    %814 = vst [vmem:[#allocation2 + $0x58] sm:$0xff] %v663
    %815 = vst [vmem:[#allocation2 + $0x60] sm:$0xff] %v727
    %816 = vst.msk [vmem:[#allocation2 + $0x68] sm:$0xff] %vm808, %v791
    %817 = vst [vmem:[#allocation2 + $0x70] sm:$0xff] %v410
    %818 = vst [vmem:[#allocation2 + $0x78] sm:$0xff] %v474
    %819 = vst [vmem:[#allocation2 + $0x80] sm:$0xff] %v538
    %820 = vst [vmem:[#allocation2 + $0x88] sm:$0xff] %v602
    %821 = vst [vmem:[#allocation2 + $0x90] sm:$0xff] %v666
    %822 = vst [vmem:[#allocation2 + $0x98] sm:$0xff] %v730
    %823 = vst.msk [vmem:[#allocation2 + $0xa0] sm:$0xff] %vm808, %v794
    %824 = vst [vmem:[#allocation2 + $0xa8] sm:$0xff] %v413
    %825 = vst [vmem:[#allocation2 + $0xb0] sm:$0xff] %v477
    %826 = vst [vmem:[#allocation2 + $0xb8] sm:$0xff] %v541
    %827 = vst [vmem:[#allocation2 + $0xc0] sm:$0xff] %v605
    %828 = vst [vmem:[#allocation2 + $0xc8] sm:$0xff] %v669
    %829 = vst [vmem:[#allocation2 + $0xd0] sm:$0xff] %v733
    %830 = vst.msk [vmem:[#allocation2 + $0xd8] sm:$0xff] %vm808, %v797
    %831 = vst [vmem:[#allocation2 + $0xe0] sm:$0xff] %v416
    %832 = vst [vmem:[#allocation2 + $0xe8] sm:$0xff] %v480
    %833 = vst [vmem:[#allocation2 + $0xf0] sm:$0xff] %v544
    %834 = vst [vmem:[#allocation2 + $0xf8] sm:$0xff] %v608
    %835 = vst [vmem:[#allocation2 + $0x100] sm:$0xff] %v672
    %836 = vst [vmem:[#allocation2 + $0x108] sm:$0xff] %v736
    %837 = vst.msk [vmem:[#allocation2 + $0x110] sm:$0xff] %vm808, %v800
    // Predicated region
    $region22: #{tpu_custom_call.1} parent=1 // pred_check
      _
    $region23: #{tpu_custom_call.1} parent=1 // pred_check_branch
      %839 = sbr.rel (0) target = $region25
    $region24: #{tpu_custom_call.1} parent=1 // pred_region
      %841 = vsyncadd [#allocation3], 0
      %s842 = sshll.u32 [#allocation2], 4
      %s843 = int_to_ptr.vmem [resolvable:$true] %s842
      %s844 = sshll.u32 %s5, 4
      %s845 = int_to_ptr.hbm [resolvable:$true] %s844
      %850 = dma.vmem_to_hbm [thread:$0]  %s843, 4480, %s845, [#allocation3], 896, 896, 56
    $region25: #{tpu_custom_call.1} parent=1 // pred_fallthru
      _
    // Predicated region
    $region26: #{tpu_custom_call.1} parent=1 // pred_check
      _
    $region27: #{tpu_custom_call.1} parent=1 // pred_check_branch
      %852 = sbr.rel (0) target = $region29
    $region28: #{tpu_custom_call.1} parent=1 // pred_region
      %854 = dma.done [#allocation3], 4480
    $region29: #{tpu_custom_call.1} parent=1 // pred_fallthru
      _
    %855 = vsyncpa [#allocation3], 1

</llo_original>
